<compile_context>
chip_gen: v7x
topology: tpu7x:2x2x1
jax: 0.10.0
libtpu: 0.0.40
codegen_flags: <defaults>
</compile_context>

<pallas_src>
import functools

import jax
import jax.numpy as jnp
from jax import lax
from jax.experimental import pallas as pl
from jax.experimental.pallas import tpu as pltpu

_EPS = 1e-8  # matches torch.nn.functional.cosine_similarity default eps


def _round_up(x, m):
    return ((x + m - 1) // m) * m


def _vmem_capacity_bytes():
    try:
        cap = getattr(pltpu.get_tpu_info(), "vmem_capacity_bytes", None)
        if cap:
            return int(cap)
    except Exception:
        pass
    return 64 * 1024 * 1024  # conservative fallback: v7x per-core VMEM


def _choose_tiles(n, d, itemsize, budget):
    """Pick (tm, td) so that the 2 inputs x 2 pipeline buffers, the in-kernel
    f32 temporaries and (if D is tiled) the per-row scratch fit in `budget`."""
    sub = max(8, 32 // max(1, itemsize))  # sublane multiple for the row dim
    n_pad = _round_up(n, sub)

    def rows_for(td, with_scratch):
        # 2 inputs * 2 buffers * itemsize  +  ~4 whole-tile f32 temporaries
        per_row = td * (4 * itemsize + 16)
        if with_scratch:
            per_row += 3 * 4 * 128  # (tm, 1) f32 scratch pads to 128 lanes
        return (budget // per_row) // sub * sub

    # Preferred: one chunk spanning all of D (no cross-chunk accumulator).
    tm = rows_for(d, with_scratch=False)
    if tm >= sub:
        return min(tm, n_pad), d

    # D is huge: tile the feature axis (multiples of 128) so TM stays large.
    td = d
    while td > 128:
        td = _round_up(max(td // 2, 128), 128)
        if rows_for(td, with_scratch=True) >= sub:
            break
    tm = max(sub, rows_for(td, with_scratch=True))
    return min(tm, n_pad), td


def _scl_kernel(f1_ref, f2_ref, out_ref, *scratch, n_total, d_total, mask_cols):
    i = pl.program_id(0)   # row-tile index   ("parallel")
    j = pl.program_id(1)   # feature-chunk    ("arbitrary", innermost)
    nd = pl.num_programs(1)
    tm, td = f1_ref.shape

    f1 = f1_ref[...].astype(jnp.float32)
    f2 = f2_ref[...].astype(jnp.float32)

    if mask_cols:  # static flag: last feature chunk is padded past D
        col = j * td + lax.broadcasted_iota(jnp.int32, (tm, td), 1)
        keep = col < d_total
        f1 = jnp.where(keep, f1, jnp.float32(0.0))
        f2 = jnp.where(keep, f2, jnp.float32(0.0))

    # Row-wise quantities only (no NxN matrix).
    ss1 = jnp.sum(f1 * f1, axis=1, keepdims=True)   # (TM, 1)
    ss2 = jnp.sum(f2 * f2, axis=1, keepdims=True)   # (TM, 1)
    rd = jnp.sum(f1 * f2, axis=1, keepdims=True)    # (TM, 1)

    if scratch:
        ss1_ref, ss2_ref, rd_ref = scratch

        @pl.when(j == 0)
        def _init():
            ss1_ref[...] = jnp.zeros_like(ss1_ref)
            ss2_ref[...] = jnp.zeros_like(ss2_ref)
            rd_ref[...] = jnp.zeros_like(rd_ref)

        ss1_ref[...] += ss1
        ss2_ref[...] += ss2
        rd_ref[...] += rd

    def _finalize():
        if scratch:
            a1, a2, ad = ss1_ref[...], ss2_ref[...], rd_ref[...]
        else:
            a1, a2, ad = ss1, ss2, rd
        # 1 / max(sqrt(x), eps) == min(rsqrt(x), 1/eps); rsqrt runs on the EUP.
        inv_cap = jnp.float32(1.0 / _EPS)
        inv1 = jnp.minimum(lax.rsqrt(a1), inv_cap)
        inv2 = jnp.minimum(lax.rsqrt(a2), inv_cap)
        diag = ad * inv1 * inv2                                  # (TM, 1)
        # Zero rows belonging to the padded tail of the last row tile.
        row = i * tm + lax.broadcasted_iota(jnp.int32, (tm, 1), 0)
        diag = jnp.where(row < n_total, diag, jnp.float32(0.0))
        out_ref[...] = jnp.broadcast_to(jnp.sum(diag), out_ref.shape)

    if scratch:
        pl.when(j == nd - 1)(_finalize)
    else:
        _finalize()  # single feature chunk: every grid step finalizes its rows


def scl_loss(feature_1, feature_2, temperature=0.07):
    """Pallas-backed equivalent of SCL().forward(feature_1, feature_2)."""
    del temperature  # unused in the reference forward pass
    assert feature_1.shape == feature_2.shape and feature_1.ndim == 2
    n, d = feature_1.shape
    itemsize = jnp.dtype(feature_1.dtype).itemsize

    # Generation-aware VMEM budgeting: ~75% of physical VMEM, capped at 96 MiB
    # (v5e/v6e: 128 MiB physical -> 96 MiB limit; v7x: 64 MiB -> 48 MiB).
    cap = _vmem_capacity_bytes()
    vmem_limit = int(min(cap * 3 // 4, 96 * 1024 * 1024))
    vmem_limit = max(vmem_limit, 16 * 1024 * 1024)
    budget = max(vmem_limit - 4 * 1024 * 1024, 8 * 1024 * 1024)

    tm, td = _choose_tiles(n, d, itemsize, budget)
    num_row_tiles = -(-n // tm)
    num_d_chunks = -(-d // td)

    kernel = functools.partial(
        _scl_kernel,
        n_total=n,
        d_total=d,
        mask_cols=(num_d_chunks > 1 and d % td != 0),
    )

    scratch_shapes = []
    if num_d_chunks > 1:
        scratch_shapes = [pltpu.VMEM((tm, 1), jnp.float32) for _ in range(3)]

    partials = pl.pallas_call(
        kernel,
        out_shape=jax.ShapeDtypeStruct((num_row_tiles, 8, 128), jnp.float32),
        grid_spec=pltpu.PrefetchScalarGridSpec(
            num_scalar_prefetch=0,
            grid=(num_row_tiles, num_d_chunks),
            in_specs=[
                pl.BlockSpec((tm, td), lambda i, j: (i, j)),
                pl.BlockSpec((tm, td), lambda i, j: (i, j)),
            ],
            out_specs=pl.BlockSpec((1, 8, 128), lambda i, j: (i, 0, 0)),
            scratch_shapes=scratch_shapes,
        ),
        compiler_params=pltpu.CompilerParams(
            dimension_semantics=("parallel", "arbitrary"),
            vmem_limit_bytes=vmem_limit,
        ),
    )(feature_1, feature_2)  # stream native dtype; upcast happens per tile

    # Tiny final reduction / negate / divide-by-N in plain JAX.
    return -jnp.sum(partials[:, 0, 0]) / jnp.float32(n)


def _scl_ref(f1, f2):
    # Pure-JAX reference mirroring the PyTorch module, for verification.
    f1 = f1.astype(jnp.float32)
    f2 = f2.astype(jnp.float32)
    n1 = jnp.maximum(jnp.linalg.norm(f1, axis=1, keepdims=True), _EPS)
    n2 = jnp.maximum(jnp.linalg.norm(f2, axis=1, keepdims=True), _EPS)
    sim = (f1 / n1) @ (f2 / n2).T
    n = f1.shape[0]
    sim = sim * jnp.eye(n, dtype=jnp.float32)
    return jnp.sum(-jnp.sum(sim, axis=1)) / n


if __name__ == "__main__":
    key = jax.random.PRNGKey(0)
    k1, k2 = jax.random.split(key)
    N, D = 8, 32  # small batch of feature vectors
    feature_1 = jax.random.normal(k1, (N, D), dtype=jnp.float32)
    feature_2 = jax.random.normal(k2, (N, D), dtype=jnp.float32)

    loss = scl_loss(feature_1, feature_2)
    jax.block_until_ready(loss)

    ref = _scl_ref(feature_1, feature_2)
    assert jnp.allclose(loss, ref, atol=1e-5, rtol=1e-5), (loss, ref)

    print("KERNEL_OK")
</pallas_src>

<mosaic_0001>
module attributes {stable_mosaic.version = 11 : i64} {
  func.func @_scl_kernel(%arg0: i32, %arg1: i32, %arg2: memref<8x32xf32, #tpu.memory_space<vmem>>, %arg3: memref<8x32xf32, #tpu.memory_space<vmem>>, %arg4: memref<1x8x128xf32, #tpu.memory_space<vmem>>) attributes {dimension_semantics = [#tpu.dimension_semantics<parallel>, #tpu.dimension_semantics<arbitrary>], iteration_bounds = array<i64: 1, 1>, scalar_prefetch = 0 : i64, scratch_operands = 0 : i64, tpu.core_type = #tpu.core_type<tc>, window_params = [{transform_indices = @transform_0, window_bounds = array<i64: 8, 32>}, {transform_indices = @transform_1, window_bounds = array<i64: 8, 32>}, {transform_indices = @transform_2, window_bounds = array<i64: 1, 8, 128>}]} {
    %c0 = arith.constant 0 : index
    %c0_0 = arith.constant 0 : index
    %0 = vector.load %arg2[%c0, %c0_0] : memref<8x32xf32, #tpu.memory_space<vmem>>, vector<8x32xf32>
    %c0_1 = arith.constant 0 : index
    %c0_2 = arith.constant 0 : index
    %1 = vector.load %arg3[%c0_1, %c0_2] : memref<8x32xf32, #tpu.memory_space<vmem>>, vector<8x32xf32>
    %2 = arith.mulf %0, %0 : vector<8x32xf32>
    %cst = arith.constant dense<0.000000e+00> : vector<8xf32>
    %3 = vector.multi_reduction <add>, %2, %cst [1] : vector<8x32xf32> to vector<8xf32>
    %4 = vector.shape_cast %3 : vector<8xf32> to vector<8x1xf32>
    %5 = arith.mulf %1, %1 : vector<8x32xf32>
    %cst_3 = arith.constant dense<0.000000e+00> : vector<8xf32>
    %6 = vector.multi_reduction <add>, %5, %cst_3 [1] : vector<8x32xf32> to vector<8xf32>
    %7 = vector.shape_cast %6 : vector<8xf32> to vector<8x1xf32>
    %8 = arith.mulf %0, %1 : vector<8x32xf32>
    %cst_4 = arith.constant dense<0.000000e+00> : vector<8xf32>
    %9 = vector.multi_reduction <add>, %8, %cst_4 [1] : vector<8x32xf32> to vector<8xf32>
    %10 = vector.shape_cast %9 : vector<8xf32> to vector<8x1xf32>
    %11 = math.rsqrt %4 : vector<8x1xf32>
    %cst_5 = arith.constant 1.000000e+08 : f32
    %12 = vector.broadcast %cst_5 : f32 to vector<8x1xf32>
    %13 = arith.minimumf %11, %12 : vector<8x1xf32>
    %14 = math.rsqrt %7 : vector<8x1xf32>
    %cst_6 = arith.constant 1.000000e+08 : f32
    %15 = vector.broadcast %cst_6 : f32 to vector<8x1xf32>
    %16 = arith.minimumf %14, %15 : vector<8x1xf32>
    %17 = arith.mulf %10, %13 : vector<8x1xf32>
    %18 = arith.mulf %17, %16 : vector<8x1xf32>
    %c8_i32 = arith.constant 8 : i32
    %19 = arith.muli %arg0, %c8_i32 : i32
    %20 = tpu.iota {dimensions = array<i32: 0>} : vector<8x1xi32>
    %21 = vector.broadcast %19 : i32 to vector<8x1xi32>
    %22 = arith.addi %21, %20 : vector<8x1xi32>
    %c8_i32_7 = arith.constant 8 : i32
    %23 = vector.broadcast %c8_i32_7 : i32 to vector<8x1xi32>
    %24 = arith.cmpi slt, %22, %23 : vector<8x1xi32>
    %cst_8 = arith.constant 0.000000e+00 : f32
    %25 = vector.broadcast %cst_8 : f32 to vector<8x1xf32>
    %26 = arith.select %24, %18, %25 : vector<8x1xi1>, vector<8x1xf32>
    %27 = vector.shape_cast %26 : vector<8x1xf32> to vector<1x8x1xf32>
    %cst_9 = arith.constant dense<0.000000e+00> : vector<1xf32>
    %28 = vector.multi_reduction <add>, %27, %cst_9 [1, 2] : vector<1x8x1xf32> to vector<1xf32>
    %29 = vector.shape_cast %28 : vector<1xf32> to vector<1x1x1xf32>
    %30 = vector.extract %29[0, 0, 0] : f32 from vector<1x1x1xf32>
    %31 = vector.broadcast %30 : f32 to vector<1x8x128xf32>
    %c0_10 = arith.constant 0 : index
    %c0_11 = arith.constant 0 : index
    %c0_12 = arith.constant 0 : index
    %32 = vector.load %arg4[%c0_10, %c0_11, %c0_12] : memref<1x8x128xf32, #tpu.memory_space<vmem>>, vector<1x8x128xf32>
    tpu.vector_store %arg4[%c0_10, %c0_11, %c0_12], %31 {strides = array<i32>} : memref<1x8x128xf32, #tpu.memory_space<vmem>>, vector<1x8x128xf32>,
    return
  }
  func.func @transform_0(%arg0: i32, %arg1: i32) -> (i32, i32) {
    %c0_i32 = arith.constant 0 : i32
    return %arg0, %arg1 : i32, i32
  }
  func.func @transform_1(%arg0: i32, %arg1: i32) -> (i32, i32) {
    %c0_i32 = arith.constant 0 : i32
    return %arg0, %arg1 : i32, i32
  }
  func.func @transform_2(%arg0: i32, %arg1: i32) -> (i32, i32, i32) {
    %c0_i32 = arith.constant 0 : i32
    %c0_i32_0 = arith.constant 0 : i32
    %c0_i32_1 = arith.constant 0 : i32
    return %arg0, %c0_i32, %c0_i32_0 : i32, i32, i32
  }
}

</mosaic_0001>

<llo_original>
// kernel: tpu_custom_call.1
$region0: #{tpu_custom_call.1}
  #allocation0 [shape = 'u32[]', space=smem, size = 0x4, offset = 0x4, fixed_abs, tag = 'smem constant byte address 0x4 - core index']
  #allocation1 [shape = 'u32[144,128]{1,0:T(1,128)}', space=vmem, size = 0x12000, scoped, tag = 'internal scratch']
  %s0 = inlined_call_operand.hbm [shape: f32[8,32], index: 0, kind: input, shape index: {}]
  %s1 = inlined_call_operand.hbm [shape: f32[8,32], index: 1, kind: input, shape index: {}]
  %s2 = inlined_call_operand.hbm [shape: f32[1,8,128], index: 2, kind: output, shape index: {}]
  %s3 = sld [smem:[#allocation0]]
  $region26: #{tpu_custom_call.1} parent=0
    _
  %s5 = ssub.s32 1, %s3
  %s6 = scalar_select 0, %s5, %s3
  $region1: #{tpu_custom_call.1} parent=0
    #allocation2 [shape = 'u8[4096]{0}', space=vmem, size = 0x1000, scoped, tag = 'input window, operand 0, single buffered']
    #allocation3 [shape = 's32[1]{0}', space=sflag, size = 0x4, scoped, tag = 'scoped memory for tpu_custom_call.1']
    #allocation4 [shape = 's32[1]{0}', space=sflag, size = 0x4, scoped, tag = 'scoped memory for tpu_custom_call.1']
    #allocation5 [shape = 'u8[4096]{0}', space=vmem, size = 0x1000, scoped, tag = 'input window, operand 1, single buffered']
    #allocation6 [shape = 's32[1]{0}', space=sflag, size = 0x4, scoped, tag = 'scoped memory for tpu_custom_call.1']
    #allocation7 [shape = 'u8[4096]{0}', space=vmem, size = 0x1000, scoped, tag = 'output window, operand 0, single buffered']
    %7 = vsyncpa [#allocation3], 0
    %8 = vsyncpa [#allocation6], 0
    %9 = vsyncpa [#allocation4], 0
    // Predicated region
    $region2: #{tpu_custom_call.1} parent=1 // pred_check
      _
    $region3: #{tpu_custom_call.1} parent=1 // pred_check_branch
      %11 = sbr.rel (0) target = $region5
    $region4: #{tpu_custom_call.1} parent=1 // pred_region
      %s13 = ssub.s32 128, 128
      %14 = vsyncadd [#allocation3], %s13
      %s16 = sshll.u32 [#allocation2], 4
      %s17 = int_to_ptr.vmem [resolvable:$true] %s16
      %19 = dma.hbm_to_vmem [thread:$0]  %s0, 128, %s17, [#allocation3]
    $region5: #{tpu_custom_call.1} parent=1 // pred_fallthru
      _
    // Predicated region
    $region6: #{tpu_custom_call.1} parent=1 // pred_check
      _
    $region7: #{tpu_custom_call.1} parent=1 // pred_check_branch
      %21 = sbr.rel (0) target = $region9
    $region8: #{tpu_custom_call.1} parent=1 // pred_region
      %s23 = ssub.s32 128, 128
      %24 = vsyncadd [#allocation6], %s23
      %s26 = sshll.u32 [#allocation5], 4
      %s27 = int_to_ptr.vmem [resolvable:$true] %s26
      %29 = dma.hbm_to_vmem [thread:$0]  %s1, 128, %s27, [#allocation6]
    $region9: #{tpu_custom_call.1} parent=1 // pred_fallthru
      _
    // Predicated region
    $region10: #{tpu_custom_call.1} parent=1 // pred_check
      _
    $region11: #{tpu_custom_call.1} parent=1 // pred_check_branch
      %31 = sbr.rel (0) target = $region13
    $region12: #{tpu_custom_call.1} parent=1 // pred_region
      %32 = dma.done [#allocation3], 128
    $region13: #{tpu_custom_call.1} parent=1 // pred_fallthru
      _
    // Predicated region
    $region14: #{tpu_custom_call.1} parent=1 // pred_check
      _
    $region15: #{tpu_custom_call.1} parent=1 // pred_check_branch
      %34 = sbr.rel (0) target = $region17
    $region16: #{tpu_custom_call.1} parent=1 // pred_region
      %35 = dma.done [#allocation6], 128
    $region17: #{tpu_custom_call.1} parent=1 // pred_fallthru
      _
    %v36 = vld [vmem:[#allocation2] sm:$0xff]
    %v37 = vld [vmem:[#allocation5] sm:$0xff]
    %v38 = vmul.f32 %v36, %v36
    %vm39 = vcmask 261120
    %v40 = vsel %vm39, %v38, 0.0
    %41 = vadd.xlane.f32.xlu0 %v40
    %v42 = vpop.xlane.xlu0 %41
    %v43 = vmul.f32 %v37, %v37
    %v44 = vsel %vm39, %v43, 0.0
    %45 = vadd.xlane.f32.xlu0 %v44
    %v46 = vpop.xlane.xlu0 %45
    %v47 = vmul.f32 %v36, %v37
    %v48 = vsel %vm39, %v47, 0.0
    %49 = vadd.xlane.f32.xlu0 %v48
    %v50 = vpop.xlane.xlu0 %49
    %v51 = vrsqrt.pop %v42
    %v52 = vmin.f32 %v51, 1e+08
    %v53 = vrsqrt.pop %v46
    %v54 = vmin.f32 %v53, 1e+08
    %v55 = vmul.f32 %v50, %v52
    %v56 = vmul.f32 %v55, %v54
    %s57 = smul.u32 0, 8
    %v58 = vlaneseq
    %v59 = vshrl.u32 %v58, 7
    %v60 = vstv %s57
    %v61 = vadd.s32 %v60, %v59
    %vm62 = vcmp.lt.s32.totalorder %v61, 8
    %v63 = vsel %vm62, %v56, 0.0
    %vm64 = vcmask 7168
    %v65 = vsel %vm64, %v63, 0.0
    %66 = vadd.xlane.f32.xlu0 %v65
    %v67 = vpop.xlane.xlu0 %66
    %v68 = vrot.slane %v67, 4
    %v69 = vadd.f32 %v67, %v68
    %v70 = vrot.slane %v69, 2
    %v71 = vadd.f32 %v69, %v70
    %v72 = vrot.slane %v71, 1
    %v73 = vadd.f32 %v71, %v72
    %s74 = vtos %v73
    %v75 = vstv %s74
    %76 = vst [vmem:[#allocation7] sm:$0xff] %v75
    // Predicated region
    $region18: #{tpu_custom_call.1} parent=1 // pred_check
      _
    $region19: #{tpu_custom_call.1} parent=1 // pred_check_branch
      %78 = sbr.rel (0) target = $region21
    $region20: #{tpu_custom_call.1} parent=1 // pred_region
      %s80 = ssub.s32 128, 128
      %81 = vsyncadd [#allocation4], %s80
      %s83 = sshll.u32 [#allocation7], 4
      %s84 = int_to_ptr.vmem [resolvable:$true] %s83
      %86 = dma.vmem_to_hbm [thread:$0]  %s84, 128, %s2, [#allocation4]
    $region21: #{tpu_custom_call.1} parent=1 // pred_fallthru
      _
    // Predicated region
    $region22: #{tpu_custom_call.1} parent=1 // pred_check
      _
    $region23: #{tpu_custom_call.1} parent=1 // pred_check_branch
      %88 = sbr.rel (0) target = $region25
    $region24: #{tpu_custom_call.1} parent=1 // pred_region
      %89 = dma.done [#allocation4], 128
    $region25: #{tpu_custom_call.1} parent=1 // pred_fallthru
      _
    %90 = vsyncpa [#allocation3], 1
    %91 = vsyncpa [#allocation6], 1
    %92 = vsyncpa [#allocation4], 1

</llo_original>
